<compile_context>
chip_gen: v5e
topology: v5e:2x2
jax: 0.10.0
libtpu: 0.0.40
codegen_flags: <defaults>
</compile_context>

<pallas_src>
from functools import partial

import jax
import jax.numpy as jnp
from jax.experimental import pallas as pl
from jax.experimental.pallas import tpu as pltpu


def _conv_in_lrelu_kernel(x_ref, w_ref, o_ref, *, p):
    """Fused conv (single matmul) + InstanceNorm + LeakyReLU for one sample /
    one C_out tile.

    x_ref: (1, K16, P) bf16, K16 = 16*C_in, P = Ho*Wo (tap-stacked input)
    w_ref: (TCO, K16)  bf16
    o_ref: (1, TCO, P) out_dtype (channel-major, P on the lane axis)
    """
    # Conv: one MXU matmul over the full contraction dim, f32 accumulation.
    acc = jnp.dot(w_ref[...], x_ref[0], preferred_element_type=jnp.float32)

    # InstanceNorm2d (affine=False, eps=1e-5, biased variance).  Conv bias is
    # mathematically cancelled by the normalization and was dropped upstream.
    # Two-pass centered statistics for precision; the centered tensor `d` is
    # reused for the normalize so no extra full-tile temporary pass is needed.
    inv_p = 1.0 / p
    mean = jnp.sum(acc, axis=1, keepdims=True) * inv_p
    d = acc - mean
    var = jnp.sum(d * d, axis=1, keepdims=True) * inv_p
    y = d * jax.lax.rsqrt(var + 1e-5)

    # LeakyReLU(0.2): single VPU max.
    y = jnp.maximum(y, 0.2 * y)
    o_ref[0] = y.astype(o_ref.dtype)


def _phase_flatten(x):
    """Reflect-pad and rearrange (N,C,H,W) so the k=4/s=2 conv becomes a
    single matmul over lane-aligned RHS slabs.

    Returns (x_stack, ho, wo) with x_stack: (N, 16*C, Ho*Wo) where
      x_stack[n, (((qi*2+qj)*2+a)*2+b)*C + c, r*Wo + s]
        = xp[n, c, 2*(r+qi)+a, 2*(s+qj)+b]
    (xp = reflect-padded input).  Both row/col taps are pre-stacked along K,
    so the kernel never slices at a non-128-aligned lane offset.
    """
    n, c, h, w = x.shape
    xp = jnp.pad(x, ((0, 0), (0, 0), (1, 1), (1, 1)), mode="reflect")
    ho, wo = h // 2, w // 2
    rp, sp = ho + 1, wo + 1
    xr = xp.reshape(n, c, rp, 2, sp, 2)      # [n,c,rr,a,ss,b] = xp[n,c,2rr+a,2ss+b]
    taps = []
    for qi in (0, 1):
        for qj in (0, 1):
            taps.append(xr[:, :, qi:qi + ho, :, qj:qj + wo, :])
    t = jnp.stack(taps, axis=1)              # [n, q, c, r, a, s, b], q = 2*qi+qj
    t = jnp.transpose(t, (0, 1, 4, 6, 2, 3, 5))  # [n, q, a, b, c, r, s]
    return t.reshape(n, 16 * c, ho * wo), ho, wo


def _weight_rearrange(weight):
    """(C_out, C_in, 4, 4) -> (C_out, 16*C_in), matching _phase_flatten:
    w2[co, (((qi*2+qj)*2+a)*2+b)*C_in + c] = weight[co, c, 2*qi+a, 2*qj+b]."""
    c_out, c_in, kh, kw = weight.shape
    wr = weight.reshape(c_out, c_in, 2, 2, 2, 2)   # [co, c, qi, a, qj, b]
    w2 = jnp.transpose(wr, (0, 2, 4, 3, 5, 1))     # [co, qi, qj, a, b, c]
    return w2.reshape(c_out, 16 * c_in)


@partial(jax.jit, static_argnames=("stride", "out_dtype"))
def block_forward(x, weight, bias, stride=2, out_dtype=None):
    """x: (N, C_in, H, W) NCHW; weight: (C_out, C_in, 4, 4); bias: (C_out,)."""
    n, c_in, h, w = x.shape
    c_out, c_in_w, kh, kw = weight.shape
    assert (kh, kw) == (4, 4) and c_in_w == c_in
    assert stride == 2, "this kernel specializes the module's stride=2 path"
    assert h % 2 == 0 and w % 2 == 0

    if out_dtype is None:
        out_dtype = x.dtype

    x_stack, ho, wo = _phase_flatten(x)
    x_stack = x_stack.astype(jnp.bfloat16)            # halve input DMA bytes
    w2 = _weight_rearrange(weight).astype(jnp.bfloat16)
    del bias  # exactly cancelled by InstanceNorm(affine=False)

    p = ho * wo                  # output spatial size (lane axis)
    k16 = 16 * c_in              # matmul contraction dim
    out_bytes = jnp.dtype(out_dtype).itemsize

    # ---- choose C_out tile (TCO) from a per-step VMEM footprint model -------
    def footprint(tco):
        x_b = 2 * k16 * p * 2            # bf16 input block, double-buffered
        w_b = 2 * tco * k16 * 2          # bf16 weight block, double-buffered
        o_b = 2 * tco * p * out_bytes    # output block, double-buffered
        tmp = 4 * tco * p * 4            # f32 acc + centered + y + slack
        return x_b + w_b + o_b + tmp

    budget = 40 * 1024 * 1024            # stay well under v7x's 64 MiB VMEM
    cands = [d for d in range(8, c_out + 1, 8) if c_out % d == 0] or [c_out]
    fitting = [t for t in cands if footprint(t) <= budget] or [min(cands)]
    max_steps = n * (c_out // min(fitting))
    want_steps = min(4, max_steps)       # >=2 keeps both v7x TCs busy
    good = [t for t in fitting if n * (c_out // t) >= want_steps]
    tco = max(good) if good else max(fitting)
    n_co = c_out // tco
    # TODO(synk): P-tiled streaming-stats path for P so large that even TCO=8
    #   exceeds the VMEM budget.

    vmem_limit = min(max(int(footprint(tco) * 1.25) + (4 << 20), 32 << 20),
                     64 << 20)

    # ---- grid axis order: keep the larger operand resident ------------------
    # A (sample outer):  x fetched once/sample, full weights streamed N times.
    # B (C_out outer):   weights fetched once,   x block streamed n_co times.
    x_block_bytes = k16 * p * 2
    w_total_bytes = c_out * k16 * 2
    weight_resident = (n - 1) * w_total_bytes > n * (n_co - 1) * x_block_bytes

    if weight_resident:
        grid = (n_co, n)
        x_map = lambda j, i: (i, 0, 0)
        w_map = lambda j, i: (j, 0)
        o_map = lambda j, i: (i, j, 0)
    else:
        grid = (n, n_co)
        x_map = lambda i, j: (i, 0, 0)
        w_map = lambda i, j: (j, 0)
        o_map = lambda i, j: (i, j, 0)

    kernel = partial(_conv_in_lrelu_kernel, p=p)
    out = pl.pallas_call(
        kernel,
        out_shape=jax.ShapeDtypeStruct((n, c_out, p), out_dtype),
        grid=grid,
        in_specs=[
            pl.BlockSpec((1, k16, p), x_map),
            pl.BlockSpec((tco, k16), w_map),
        ],
        out_specs=pl.BlockSpec((1, tco, p), o_map),
        compiler_params=pltpu.CompilerParams(
            dimension_semantics=("parallel", "parallel"),
            vmem_limit_bytes=vmem_limit),
    )(x_stack, w2)

    # Channel-major kernel output -> NCHW is a free reshape (no transpose).
    return out.reshape(n, c_out, ho, wo)


def _reference(x, weight, bias):
    """Pure-JAX f32 reference of the PyTorch Block forward."""
    xp = jnp.pad(x, ((0, 0), (0, 0), (1, 1), (1, 1)), mode="reflect")
    y = jax.lax.conv_general_dilated(
        xp, weight, window_strides=(2, 2), padding="VALID",
        dimension_numbers=("NCHW", "OIHW", "NCHW"))
    y = y + bias[None, :, None, None]
    mean = jnp.mean(y, axis=(2, 3), keepdims=True)
    var = jnp.mean((y - mean) ** 2, axis=(2, 3), keepdims=True)
    y = (y - mean) * jax.lax.rsqrt(var + 1e-5)
    return jnp.where(y >= 0, y, 0.2 * y)


if __name__ == "__main__":
    key = jax.random.PRNGKey(0)
    k_x, k_w, k_b = jax.random.split(key, 3)

    N, C_IN, C_OUT, H, W = 2, 4, 8, 16, 16
    x = jax.random.normal(k_x, (N, C_IN, H, W), dtype=jnp.float32)

    # PyTorch-like uniform init with bound = 1/sqrt(fan_in)
    fan_in = C_IN * 4 * 4
    bound = 1.0 / (fan_in ** 0.5)
    weight = jax.random.uniform(k_w, (C_OUT, C_IN, 4, 4),
                                minval=-bound, maxval=bound, dtype=jnp.float32)
    bias = jax.random.uniform(k_b, (C_OUT,),
                              minval=-bound, maxval=bound, dtype=jnp.float32)

    out = block_forward(x, weight, bias)
    jax.block_until_ready(out)
    assert out.shape == (N, C_OUT, H // 2, W // 2), out.shape

    # Correctness vs f32 reference (bf16 matmul operands -> relaxed tolerance).
    ref = _reference(x, weight, bias)
    max_err = float(jnp.max(jnp.abs(out - ref)))
    assert max_err < 7.5e-2, f"max abs err {max_err}"

    print("KERNEL_OK")
</pallas_src>

<mosaic_0001>
module attributes {stable_mosaic.version = 11 : i64} {
  func.func @_conv_in_lrelu_kernel(%arg0: i32, %arg1: i32, %arg2: memref<1x64x64xbf16, #tpu.memory_space<vmem>>, %arg3: memref<8x64xbf16, #tpu.memory_space<vmem>>, %arg4: memref<1x8x64xf32, #tpu.memory_space<vmem>>) attributes {dimension_semantics = [#tpu.dimension_semantics<parallel>, #tpu.dimension_semantics<parallel>], iteration_bounds = array<i64: 1, 2>, scalar_prefetch = 0 : i64, scratch_operands = 0 : i64, tpu.core_type = #tpu.core_type<tc>, window_params = [{transform_indices = @transform_0, window_bounds = array<i64: 1, 64, 64>}, {transform_indices = @transform_1, window_bounds = array<i64: 8, 64>}, {transform_indices = @transform_2, window_bounds = array<i64: 1, 8, 64>}]} {
    %c0 = arith.constant 0 : index
    %c0_0 = arith.constant 0 : index
    %0 = vector.load %arg3[%c0, %c0_0] : memref<8x64xbf16, #tpu.memory_space<vmem>>, vector<8x64xbf16>
    %c0_1 = arith.constant 0 : index
    %c0_2 = arith.constant 0 : index
    %c0_3 = arith.constant 0 : index
    %1 = vector.load %arg2[%c0_1, %c0_2, %c0_3] : memref<1x64x64xbf16, #tpu.memory_space<vmem>>, vector<1x64x64xbf16>
    %2 = vector.shape_cast %1 : vector<1x64x64xbf16> to vector<64x64xbf16>
    %cst = arith.constant dense<0.000000e+00> : vector<8x64xf32>
    %3 = tpu.matmul %0, %2, %cst {dimension_numbers = #tpu.dot_dimension_numbers<[1], [0], [0], [1], [0, 0, 1, 1], [], []>} : vector<8x64xbf16>, vector<64x64xbf16>, vector<8x64xf32> -> vector<8x64xf32>
    %cst_4 = arith.constant dense<0.000000e+00> : vector<8xf32>
    %4 = vector.multi_reduction <add>, %3, %cst_4 [1] : vector<8x64xf32> to vector<8xf32>
    %5 = vector.shape_cast %4 : vector<8xf32> to vector<8x1xf32>
    %cst_5 = arith.constant 1.562500e-02 : f32
    %6 = vector.broadcast %cst_5 : f32 to vector<8x1xf32>
    %7 = arith.mulf %5, %6 : vector<8x1xf32>
    %8 = vector.broadcast %7 : vector<8x1xf32> to vector<8x64xf32>
    %9 = arith.subf %3, %8 : vector<8x64xf32>
    %10 = arith.mulf %9, %9 : vector<8x64xf32>
    %cst_6 = arith.constant dense<0.000000e+00> : vector<8xf32>
    %11 = vector.multi_reduction <add>, %10, %cst_6 [1] : vector<8x64xf32> to vector<8xf32>
    %12 = vector.shape_cast %11 : vector<8xf32> to vector<8x1xf32>
    %cst_7 = arith.constant 1.562500e-02 : f32
    %13 = vector.broadcast %cst_7 : f32 to vector<8x1xf32>
    %14 = arith.mulf %12, %13 : vector<8x1xf32>
    %cst_8 = arith.constant 9.99999974E-6 : f32
    %15 = vector.broadcast %cst_8 : f32 to vector<8x1xf32>
    %16 = arith.addf %14, %15 : vector<8x1xf32>
    %17 = math.rsqrt %16 : vector<8x1xf32>
    %18 = vector.broadcast %17 : vector<8x1xf32> to vector<8x64xf32>
    %19 = arith.mulf %9, %18 : vector<8x64xf32>
    %cst_9 = arith.constant 2.000000e-01 : f32
    %20 = vector.broadcast %cst_9 : f32 to vector<8x64xf32>
    %21 = arith.mulf %20, %19 : vector<8x64xf32>
    %22 = arith.maximumf %19, %21 : vector<8x64xf32>
    %c0_10 = arith.constant 0 : index
    %c0_11 = arith.constant 0 : index
    %c0_12 = arith.constant 0 : index
    %23 = vector.load %arg4[%c0_10, %c0_11, %c0_12] : memref<1x8x64xf32, #tpu.memory_space<vmem>>, vector<1x8x64xf32>
    %24 = vector.shape_cast %23 : vector<1x8x64xf32> to vector<8x64xf32>
    %25 = vector.shape_cast %22 : vector<8x64xf32> to vector<1x8x64xf32>
    tpu.vector_store %arg4[%c0_10, %c0_11, %c0_12], %25 {strides = array<i32>} : memref<1x8x64xf32, #tpu.memory_space<vmem>>, vector<1x8x64xf32>,
    return
  }
  func.func @transform_0(%arg0: i32, %arg1: i32) -> (i32, i32, i32) {
    %c0_i32 = arith.constant 0 : i32
    %c0_i32_0 = arith.constant 0 : i32
    %c0_i32_1 = arith.constant 0 : i32
    return %arg1, %c0_i32, %c0_i32_0 : i32, i32, i32
  }
  func.func @transform_1(%arg0: i32, %arg1: i32) -> (i32, i32) {
    %c0_i32 = arith.constant 0 : i32
    %c0_i32_0 = arith.constant 0 : i32
    return %arg0, %c0_i32 : i32, i32
  }
  func.func @transform_2(%arg0: i32, %arg1: i32) -> (i32, i32, i32) {
    %c0_i32 = arith.constant 0 : i32
    %c0_i32_0 = arith.constant 0 : i32
    return %arg1, %arg0, %c0_i32 : i32, i32, i32
  }
}

</mosaic_0001>

<llo_original>
// kernel: block_forward.1
$region0: #{block_forward.1}
  #allocation0 [shape = 'u32[]', space=smem, size = 0x4, offset = 0x4, fixed_abs, tag = 'smem constant byte address 0x4 - core index']
  #allocation1 [shape = 'u32[72,128]{1,0:T(1,128)}', space=vmem, size = 0x9000, scoped, tag = 'internal scratch']
  %s0 = inlined_call_operand.vmem [shape: bf16[2,64,64], index: 0, kind: input, shape index: {}]
  %s1 = inlined_call_operand.vmem [shape: bf16[8,64], index: 1, kind: input, shape index: {}]
  %s2 = inlined_call_operand.vmem [shape: f32[2,8,64], index: 2, kind: output, shape index: {}]
  %s3 = sld [smem:[#allocation0]]
  $region41: #{block_forward.1} parent=0
    _
  %s5 = ssub.s32 1, %s3
  %s6 = scalar_select 0, %s5, %s3
  loop: start=0, step=1, limit=4
  $region2: #{block_forward.1} parent=0 // loop_pre_header
    _
  $region3: #{block_forward.1} parent=0 // loop_header
    %s8 = sphi 0, %s12
    %p9 = scmp.ge.s32.totalorder %s8, 4
    %s15 = sphi 0, %s27
    %s16 = sphi 0, %s23
    %s17 = sphi 0, %s15
    %s18 = sphi 0, %s16
    %s19 = sphi 0, %s17
    %s20 = sphi 0, %s18
    %s30 = sphi 0, %s32
    %s33 = sphi 0, %s30
    %s34 = sphi 0, %s33
    %s50 = sphi 0, %s34
    %s56 = sphi 0, %s58
    %s59 = sphi 0, %s56
    %s60 = sphi 0, %s59
    %s76 = sphi 0, %s60
    %s84 = sphi 0, %s86
    %s87 = sphi 0, %s84
    %s88 = sphi 0, %s87
    %s104 = sphi 0, %s88
  $region4: #{block_forward.1} parent=0 // loop_header_branch
    %11 = sbr.rel (%p9) target = $region8
  $region5: #{block_forward.1} parent=0 // loop_body
    %s13 = ssub.s32 %s8, 1
    %s14 = ssub.s32 %s8, 2
    %s21 = sadd.s32 1, %s16
    %p22 = scmp.ge.s32.totalorder %s21, 2
    %s23 = scalar_select %p22, 0, %s21
    %s24 = sadd.s32 1, %s15
    %s25 = scalar_select %p22, %s24, %s15
    %p26 = scmp.ge.s32.totalorder %s25, 1
    %s27 = scalar_select %p26, 0, %s25
    %s28 = ssub.s32 %s16, %s23
    %p29 = scmp.eq.s32.totalorder %s28, 0
    %s31 = sadd.s32 %s30, 1
    %s32 = scalar_select %p29, %s30, %s31
    %p35 = pneg %p29
    %p36 = scmp.eq.s32.totalorder %s8, 1
    %p37 = por %p35, %p36
    %p38 = scmp.ne.s32.totalorder %s30, %s33
    %p39 = scmp.eq.s32.totalorder %s8, 0
    %p40 = por %p38, %p39
    %p41 = scmp.ne.s32.totalorder %s30, %s33
    %p42 = scmp.eq.s32.totalorder %s13, 1
    %p43 = por %p41, %p42
    %p44 = scmp.ne.s32.totalorder %s33, %s34
    %p45 = scmp.eq.s32.totalorder %s13, 0
    %p46 = por %p44, %p45
    %p47 = scmp.ne.s32.totalorder %s33, %s34
    %p48 = scmp.eq.s32.totalorder %s14, 1
    %p49 = por %p47, %p48
    %p51 = scmp.ne.s32.totalorder %s34, %s50
    %p52 = scmp.eq.s32.totalorder %s14, 0
    %p53 = por %p51, %p52
    %s54 = ssub.s32 %s15, %s27
    %p55 = scmp.eq.s32.totalorder %s54, 0
    %s57 = sadd.s32 %s56, 1
    %s58 = scalar_select %p55, %s56, %s57
    %p61 = pneg %p55
    %p62 = scmp.eq.s32.totalorder %s8, 1
    %p63 = por %p61, %p62
    %p64 = scmp.ne.s32.totalorder %s56, %s59
    %p65 = scmp.eq.s32.totalorder %s8, 0
    %p66 = por %p64, %p65
    %p67 = scmp.ne.s32.totalorder %s56, %s59
    %p68 = scmp.eq.s32.totalorder %s13, 1
    %p69 = por %p67, %p68
    %p70 = scmp.ne.s32.totalorder %s59, %s60
    %p71 = scmp.eq.s32.totalorder %s13, 0
    %p72 = por %p70, %p71
    %p73 = scmp.ne.s32.totalorder %s59, %s60
    %p74 = scmp.eq.s32.totalorder %s14, 1
    %p75 = por %p73, %p74
    %p77 = scmp.ne.s32.totalorder %s60, %s76
    %p78 = scmp.eq.s32.totalorder %s14, 0
    %p79 = por %p77, %p78
    %s80 = ssub.s32 %s16, %s23
    %s81 = ssub.s32 %s15, %s27
    %s82 = sor.u32 %s80, %s81
    %p83 = scmp.eq.s32.totalorder %s82, 0
    %s85 = sadd.s32 %s84, 1
    %s86 = scalar_select %p83, %s84, %s85
    %p89 = pneg %p83
    %p90 = scmp.eq.s32.totalorder %s8, 1
    %p91 = por %p89, %p90
    %p92 = scmp.ne.s32.totalorder %s84, %s87
    %p93 = scmp.eq.s32.totalorder %s8, 0
    %p94 = por %p92, %p93
    %p95 = scmp.ne.s32.totalorder %s84, %s87
    %p96 = scmp.eq.s32.totalorder %s13, 1
    %p97 = por %p95, %p96
    %p98 = scmp.ne.s32.totalorder %s87, %s88
    %p99 = scmp.eq.s32.totalorder %s13, 0
    %p100 = por %p98, %p99
    %p101 = scmp.ne.s32.totalorder %s87, %s88
    %p102 = scmp.eq.s32.totalorder %s14, 1
    %p103 = por %p101, %p102
    %p105 = scmp.ne.s32.totalorder %s88, %s104
    %p106 = scmp.eq.s32.totalorder %s14, 0
    %p107 = por %p105, %p106
    %p108 = scmp.le.s32.totalorder 1, %s8
    %p109 = scmp.lt.s32.totalorder %s8, 3
    %p110 = pnand %p108, %p109
    %p111 = pneg %p110
    // Predicated region
    $region9: #{block_forward.1} parent=5 // pred_check
      _
    $region10: #{block_forward.1} parent=5 // pred_check_branch
      %113 = sbr.rel (%p110) target = $region12
    $region11: #{block_forward.1} parent=5 // pred_region
      %s114 = ssub.s32 %s8, 1
      // Predicated region
      $region13: #{block_forward.1} parent=11 // pred_check
        %p115 = pneg %p72
      $region14: #{block_forward.1} parent=11 // pred_check_branch
        %117 = sbr.rel (%p115) target = $region16
      $region15: #{block_forward.1} parent=11 // pred_region
        %p118 = scmp.lt.s32.totalorder %s17, 0
        %s119 = scalar_select %p118, %s17, 0
        %s120 = smul.addr %s119, 4
        %s121 = scalar_lea.vmem %s1, %s120
      $region16: #{block_forward.1} parent=11 // pred_fallthru
        _
    $region12: #{block_forward.1} parent=5 // pred_fallthru
      _
    %p122 = scmp.lt.s32.totalorder %s8, 2
    // Predicated region
    $region17: #{block_forward.1} parent=5 // pred_check
      %p123 = pneg %p122
    $region18: #{block_forward.1} parent=5 // pred_check_branch
      %125 = sbr.rel (%p123) target = $region20
    $region19: #{block_forward.1} parent=5 // pred_region
      // Predicated region
      $region21: #{block_forward.1} parent=19 // pred_check
        %p126 = pneg %p40
      $region22: #{block_forward.1} parent=19 // pred_check_branch
        %128 = sbr.rel (%p126) target = $region24
      $region23: #{block_forward.1} parent=19 // pred_region
        %p129 = scmp.lt.s32.totalorder %s16, 1
        %s130 = scalar_select %p129, %s16, 1
        %s131 = smul.addr %s130, 8
        %s132 = smul.addr %s131, 4
        %s133 = scalar_lea.vmem %s0, %s132
      $region24: #{block_forward.1} parent=19 // pred_fallthru
        _
    $region20: #{block_forward.1} parent=5 // pred_fallthru
      _
    %p134 = scmp.le.s32.totalorder 1, %s8
    %p135 = scmp.lt.s32.totalorder %s8, 3
    %p136 = pnand %p134, %p135
    %p137 = pneg %p136
    // Predicated region
    $region25: #{block_forward.1} parent=5 // pred_check
      _
    $region26: #{block_forward.1} parent=5 // pred_check_branch
      %139 = sbr.rel (%p136) target = $region28
    $region27: #{block_forward.1} parent=5 // pred_region
      %s140 = ssub.s32 %s8, 1
      %p141 = scmp.lt.s32.totalorder %s18, 1
      %s142 = scalar_select %p141, %s18, 1
      %s143 = smul.addr %s142, 8
      %s144 = smul.addr %s143, 4
      %s145 = scalar_lea.vmem %s0, %s144
      %p146 = pneg %p46
      %p147 = pneg %p43
      %p148 = scmp.lt.s32.totalorder %s17, 0
      %s149 = scalar_select %p148, %s17, 0
      %s150 = smul.addr %s149, 4
      %s151 = scalar_lea.vmem %s1, %s150
      %p152 = pneg %p72
      %p153 = pneg %p69
      %p154 = pneg %p100
      %p155 = pneg %p97
      %p156 = scmp.lt.s32.totalorder %s18, 1
      %s157 = scalar_select %p156, %s18, 1
      %p158 = scmp.lt.s32.totalorder %s17, 0
      %s159 = scalar_select %p158, %s17, 0
      %s160 = sadd.s32 %s159, %s157
      %s161 = smul.addr %s160, 8
      %s162 = scalar_lea.vmem %s2, %s161
      %p163 = scmp.lt.s32.totalorder %s18, 1
      %s164 = scalar_select %p163, %s18, 1
      %s165 = smul.addr %s164, 8
      %s166 = smul.addr %s165, 4
      %s167 = scalar_lea.vmem %s0, %s166
      %p168 = scmp.lt.s32.totalorder %s17, 0
      %s169 = scalar_select %p168, %s17, 0
      %s170 = smul.addr %s169, 4
      %s171 = scalar_lea.vmem %s1, %s170
      %p172 = scmp.lt.s32.totalorder %s18, 1
      %s173 = scalar_select %p172, %s18, 1
      %p174 = scmp.lt.s32.totalorder %s17, 0
      %s175 = scalar_select %p174, %s17, 0
      %s176 = sadd.s32 %s175, %s173
      %s177 = smul.addr %s176, 8
      %s178 = scalar_lea.vmem %s2, %s177
      %v180 = vld [vmem:[%s171] sm:$0xf]
      %v181 = vld [vmem:[%s167] sm:$0xf]
      %v182 = vld [vmem:[%s167 + $0x4] sm:$0xf]
      %v183 = vld [vmem:[%s167 + $0x8] sm:$0xf]
      %v184 = vld [vmem:[%s167 + $0xc] sm:$0xf]
      %v185 = vld [vmem:[%s167 + $0x10] sm:$0xf]
      %v186 = vld [vmem:[%s167 + $0x14] sm:$0xf]
      %v187 = vld [vmem:[%s167 + $0x18] sm:$0xf]
      %v188 = vld [vmem:[%s167 + $0x1c] sm:$0xf]
      %v197 = vunpack.c.l.b16 %v181
      %v198 = vunpack.c.l.b16 %v182
      %v199 = vunpack.c.l.b16 %v183
      %v200 = vunpack.c.l.b16 %v184
      %v201 = vunpack.c.l.b16 %v185
      %v202 = vunpack.c.l.b16 %v186
      %v203 = vunpack.c.l.b16 %v187
      %v204 = vunpack.c.l.b16 %v188
      %v205 = vpack.c.b16 %v198, %v197
      %v206 = vpack.c.b16 %v200, %v199
      %v207 = vpack.c.b16 %v202, %v201
      %v208 = vpack.c.b16 %v204, %v203
      %vm213 = vcmask 523264
      %v215 = vsel %vm213, %v180, 0
      %217 = vmatpush.bf16.msra.mxu0 0
      %218 = vmatpush.bf16.msra.mxu0 0
      %219 = vmatpush.bf16.msra.mxu0 0
      %220 = vmatpush.bf16.msra.mxu0 0
      %221 = vmatpush.bf16.msra.mxu0 %v208
      %222 = vmatpush.bf16.msra.mxu0 %v207
      %223 = vmatpush.bf16.msra.mxu0 %v206
      %224 = vmatpush.bf16.msra.mxu0 %v205
      %225 = vmatmul.bf16.gmra.mxu0 %v215
      %v226 = vpop.f32.mrf.mxu0
      %v227 = vadd.f32 0.0, %v226
      %v228 = vpop.f32.mrf.mxu0
      %229 = vdwg.mxu0
      %v230 = vsel %vm213, %v227, 0.0
      %231 = vadd.xlane.f32.xlu0 %v230
      %v232 = vpop.xlane.xlu0 %231
      %v233 = vmul.f32 %v232, 0.015625
      %v234 = vsub.f32 %v227, %v233
      %v235 = vmul.f32 %v234, %v234
      %v236 = vsel %vm213, %v235, 0.0
      %237 = vadd.xlane.f32.xlu0 %v236
      %v238 = vpop.xlane.xlu0 %237
      %v239 = vmul.f32 %v238, 0.015625
      %v240 = vadd.f32 %v239, 1e-05
      %v241 = vrsqrt.pop %v240
      %v242 = vmul.f32 %v241, %v240
      %v243 = vmul.f32 %v242, %v241
      %v244 = vmul.f32 0.5, %v243
      %v245 = vsub.f32 1.5, %v244
      %v246 = vmul.f32 %v241, %v245
      %vm247 = vweird.f32 %v240
      %vm248 = vweird.f32 %v241
      %vm249 = vmor %vm247, %vm248
      %v250 = vsel %vm249, %v241, %v246
      %v251 = vmul.f32 %v234, %v250
      %v252 = vmul.f32 %v251, 0.2
      %v253 = vmax.f32 %v251, %v252
      %254 = vst.msk [vmem:[%s178] sm:$0xff] %vm213, %v253
      %p255 = scmp.lt.s32.totalorder %s18, 1
      %s256 = scalar_select %p255, %s18, 1
      %p257 = scmp.lt.s32.totalorder %s17, 0
      %s258 = scalar_select %p257, %s17, 0
      %s259 = sadd.s32 %s258, %s256
      %s260 = smul.addr %s259, 8
      %s261 = scalar_lea.vmem %s2, %s260
      // Predicated region
      $region29: #{block_forward.1} parent=27 // pred_check
        %p262 = pneg %p97
      $region30: #{block_forward.1} parent=27 // pred_check_branch
        %264 = sbr.rel (%p262) target = $region32
      $region31: #{block_forward.1} parent=27 // pred_region
        _
      $region32: #{block_forward.1} parent=27 // pred_fallthru
        _
    $region28: #{block_forward.1} parent=5 // pred_fallthru
      _
    %p265 = scmp.le.s32.totalorder 2, %s8
    // Predicated region
    $region33: #{block_forward.1} parent=5 // pred_check
      %p266 = pneg %p265
    $region34: #{block_forward.1} parent=5 // pred_check_branch
      %268 = sbr.rel (%p266) target = $region36
    $region35: #{block_forward.1} parent=5 // pred_region
      %s269 = ssub.s32 %s8, 2
      // Predicated region
      $region37: #{block_forward.1} parent=35 // pred_check
        %p270 = pneg %p103
      $region38: #{block_forward.1} parent=35 // pred_check_branch
        %272 = sbr.rel (%p270) target = $region40
      $region39: #{block_forward.1} parent=35 // pred_region
        %p273 = scmp.lt.s32.totalorder %s20, 1
        %s274 = scalar_select %p273, %s20, 1
        %p275 = scmp.lt.s32.totalorder %s19, 0
        %s276 = scalar_select %p275, %s19, 0
        %s277 = sadd.s32 %s276, %s274
        %s278 = smul.addr %s277, 8
        %s279 = scalar_lea.vmem %s2, %s278
      $region40: #{block_forward.1} parent=35 // pred_fallthru
        _
    $region36: #{block_forward.1} parent=5 // pred_fallthru
      _
  $region6: #{block_forward.1} parent=0 // loop_footer
    %s12 = sadd.s32 1, %s8
  $region7: #{block_forward.1} parent=0 // loop_footer_branch
    %7 = sbr.rel target = $region3
  $region8: #{block_forward.1} parent=0 // loop_exit
    _

</llo_original>
